<compile_context>
chip_gen: v7x
topology: tpu7x:2x2x1
jax: 0.10.0
libtpu: 0.0.40
codegen_flags: <defaults>
</compile_context>

<pallas_src>
import jax
import jax.numpy as jnp
from jax.experimental import pallas as pl
from jax.experimental.pallas import tpu as pltpu


def _vmax_kernel(x_ref, w_ref, o_ref):
    """One grid step of the dense weighted max-aggregation.

    x_ref: (tF, tNs, tT)  source-node features (F = B*C rows, lanes = T)
    w_ref: (tNs, N)       edge weights, w[u, v] = weight of edge u -> v
    o_ref: (tF, N, tT)    running elementwise max, resident across grid axis 2
    """
    si = pl.program_id(2)
    x = x_ref[...]          # (tF, tNs, tT)
    w = w_ref[...]          # (tNs, N)
    n_src = x.shape[1]

    # Unrolled VPU broadcast-FMA-style max over the source nodes of this tile.
    def contrib(u):
        wu = w[u:u + 1, :][:, :, None]      # (1, N, 1)   weights u -> all v
        xu = x[:, u:u + 1, :]               # (tF, 1, tT) features of source u
        return wu * xu                      # (tF, N, tT)

    acc = contrib(0)
    for u in range(1, n_src):
        acc = jnp.maximum(acc, contrib(u))

    @pl.when(si == 0)
    def _():
        o_ref[...] = acc.astype(o_ref.dtype)

    @pl.when(si > 0)
    def _():
        o_ref[...] = jnp.maximum(o_ref[...], acc.astype(o_ref.dtype))


def _pick_src_tile(n):
    # Reduction (source-node) tile: must divide N exactly (OOB padding would
    # corrupt the max) and be a multiple of 8 (sublane rule) unless full-dim.
    if n % 8 != 0:
        return n
    for cand in (32, 16, 8):
        if n % cand == 0:
            return cand
    return n


def _pick_f_tile(f, n, t_tile, target_bytes=512 * 1024):
    # Aim for ~512 KiB output blocks: big enough to hide per-step overhead,
    # small enough that double-buffered in+out stays a few MiB of VMEM.
    rows = max(1, target_bytes // (n * t_tile * 4))
    return int(min(f, rows))


def v_max_pallas(v, w):
    """out[b, c, v, t] = max_u w[u, v] * V[b, c, u, t]  (dense graph).

    v: (B, C, N, T) float32, w: (N, N) float32.
    """
    B, C, N, T = v.shape
    assert w.shape == (N, N)
    F = B * C
    x = v.reshape(F, N, T)                       # free reshape, no HBM pass

    t_tile = T if T <= 256 else 256              # lane axis: full or 128-mult
    s_tile = _pick_src_tile(N)                   # reduction axis
    f_tile = _pick_f_tile(F, N, t_tile)

    grid = (pl.cdiv(F, f_tile), pl.cdiv(T, t_tile), N // s_tile)

    flops = 2 * F * T * N * N                    # one mul + one max per term
    bytes_accessed = 4 * (2 * F * N * T + N * N)

    out = pl.pallas_call(
        _vmax_kernel,
        out_shape=jax.ShapeDtypeStruct((F, N, T), v.dtype),
        grid_spec=pltpu.PrefetchScalarGridSpec(
            num_scalar_prefetch=0,
            grid=grid,
            in_specs=[
                pl.BlockSpec((f_tile, s_tile, t_tile),
                             lambda fi, ti, si: (fi, si, ti)),
                pl.BlockSpec((s_tile, N),
                             lambda fi, ti, si: (si, 0)),
            ],
            out_specs=pl.BlockSpec((f_tile, N, t_tile),
                                   lambda fi, ti, si: (fi, 0, ti)),
        ),
        compiler_params=pltpu.CompilerParams(
            dimension_semantics=("parallel", "parallel", "arbitrary")),
        cost_estimate=pl.CostEstimate(
            flops=flops, transcendentals=0, bytes_accessed=bytes_accessed),
    )(x, w)
    return out.reshape(B, C, N, T)


class V_Max:
    """JAX/Pallas port of the PyTorch V_Max module.

    The DGL graph G (edge data 'w') is represented by a dense edge-weight
    matrix W of shape (N, N) with W[u, v] the weight of edge u -> v.
    """

    def __init__(self, args=None):
        pass

    def __call__(self, V, W, V_in=None, adp=None):
        # V_in and adp are unused, exactly as in the PyTorch forward.
        return v_max_pallas(V, W)


def _reference(v, w):
    # Plain-JAX dense max-aggregation (matches DGL u_mul_e + max reduce).
    return jnp.max(w[None, None, :, :, None] * v[:, :, :, None, :], axis=2)


if __name__ == "__main__":
    key = jax.random.PRNGKey(0)

    def check(b, c, n, t, k):
        k_v, k_w = jax.random.split(k)
        v = jax.random.normal(k_v, (b, c, n, t), jnp.float32)
        # Dense edge weights as produced from the adaptive adjacency `adp`
        # (row-softmax, so every destination node has in-edges).
        w = jax.nn.softmax(jax.random.normal(k_w, (n, n), jnp.float32), axis=1)
        mod = V_Max(None)
        out = jax.block_until_ready(mod(v, w))
        ref = _reference(v, w)
        assert out.shape == (b, c, n, t)
        assert jnp.allclose(out, ref, atol=1e-5, rtol=1e-5)

    k0, k1, k2 = jax.random.split(key, 3)
    # Small shape implied by the module: batch=2, channels=4, nodes=8, T=16.
    check(2, 4, 8, 16, k0)
    # Exercise time-axis tiling with a ragged tail (grid = (1, 2, 1)).
    check(2, 4, 16, 384, k1)
    # Exercise the source-node reduction axis / running-max accumulator
    # (grid = (1, 1, 3)).
    check(1, 2, 48, 128, k2)

    print("KERNEL_OK")
</pallas_src>

<mosaic_0001>
module attributes {stable_mosaic.version = 11 : i64} {
  func.func @_vmax_kernel(%arg0: i32, %arg1: i32, %arg2: i32, %arg3: memref<8x8x16xf32, #tpu.memory_space<vmem>>, %arg4: memref<8x8xf32, #tpu.memory_space<vmem>>, %arg5: memref<8x8x16xf32, #tpu.memory_space<vmem>>) attributes {dimension_semantics = [#tpu.dimension_semantics<parallel>, #tpu.dimension_semantics<parallel>, #tpu.dimension_semantics<arbitrary>], iteration_bounds = array<i64: 1, 1, 1>, scalar_prefetch = 0 : i64, scratch_operands = 0 : i64, tpu.core_type = #tpu.core_type<tc>, window_params = [{transform_indices = @transform_0, window_bounds = array<i64: 8, 8, 16>}, {transform_indices = @transform_1, window_bounds = array<i64: 8, 8>}, {transform_indices = @transform_2, window_bounds = array<i64: 8, 8, 16>}]} {
    %c0 = arith.constant 0 : index
    %c0_0 = arith.constant 0 : index
    %c0_1 = arith.constant 0 : index
    %0 = vector.load %arg3[%c0, %c0_0, %c0_1] : memref<8x8x16xf32, #tpu.memory_space<vmem>>, vector<8x8x16xf32>
    %c0_2 = arith.constant 0 : index
    %c0_3 = arith.constant 0 : index
    %1 = vector.load %arg4[%c0_2, %c0_3] : memref<8x8xf32, #tpu.memory_space<vmem>>, vector<8x8xf32>
    %2 = vector.extract_strided_slice %1 {offsets = [0, 0], sizes = [1, 8], strides = [1, 1]} : vector<8x8xf32> to vector<1x8xf32>
    %3 = vector.shape_cast %2 : vector<1x8xf32> to vector<1x8x1xf32>
    %4 = vector.extract_strided_slice %0 {offsets = [0, 0, 0], sizes = [8, 1, 16], strides = [1, 1, 1]} : vector<8x8x16xf32> to vector<8x1x16xf32>
    %5 = vector.broadcast %3 : vector<1x8x1xf32> to vector<8x8x16xf32>
    %6 = vector.broadcast %4 : vector<8x1x16xf32> to vector<8x8x16xf32>
    %7 = arith.mulf %5, %6 : vector<8x8x16xf32>
    %8 = vector.extract_strided_slice %1 {offsets = [1, 0], sizes = [1, 8], strides = [1, 1]} : vector<8x8xf32> to vector<1x8xf32>
    %9 = vector.shape_cast %8 : vector<1x8xf32> to vector<1x8x1xf32>
    %10 = vector.extract_strided_slice %0 {offsets = [0, 1, 0], sizes = [8, 1, 16], strides = [1, 1, 1]} : vector<8x8x16xf32> to vector<8x1x16xf32>
    %11 = vector.broadcast %9 : vector<1x8x1xf32> to vector<8x8x16xf32>
    %12 = vector.broadcast %10 : vector<8x1x16xf32> to vector<8x8x16xf32>
    %13 = arith.mulf %11, %12 : vector<8x8x16xf32>
    %14 = arith.maximumf %7, %13 : vector<8x8x16xf32>
    %15 = vector.extract_strided_slice %1 {offsets = [2, 0], sizes = [1, 8], strides = [1, 1]} : vector<8x8xf32> to vector<1x8xf32>
    %16 = vector.shape_cast %15 : vector<1x8xf32> to vector<1x8x1xf32>
    %17 = vector.extract_strided_slice %0 {offsets = [0, 2, 0], sizes = [8, 1, 16], strides = [1, 1, 1]} : vector<8x8x16xf32> to vector<8x1x16xf32>
    %18 = vector.broadcast %16 : vector<1x8x1xf32> to vector<8x8x16xf32>
    %19 = vector.broadcast %17 : vector<8x1x16xf32> to vector<8x8x16xf32>
    %20 = arith.mulf %18, %19 : vector<8x8x16xf32>
    %21 = arith.maximumf %14, %20 : vector<8x8x16xf32>
    %22 = vector.extract_strided_slice %1 {offsets = [3, 0], sizes = [1, 8], strides = [1, 1]} : vector<8x8xf32> to vector<1x8xf32>
    %23 = vector.shape_cast %22 : vector<1x8xf32> to vector<1x8x1xf32>
    %24 = vector.extract_strided_slice %0 {offsets = [0, 3, 0], sizes = [8, 1, 16], strides = [1, 1, 1]} : vector<8x8x16xf32> to vector<8x1x16xf32>
    %25 = vector.broadcast %23 : vector<1x8x1xf32> to vector<8x8x16xf32>
    %26 = vector.broadcast %24 : vector<8x1x16xf32> to vector<8x8x16xf32>
    %27 = arith.mulf %25, %26 : vector<8x8x16xf32>
    %28 = arith.maximumf %21, %27 : vector<8x8x16xf32>
    %29 = vector.extract_strided_slice %1 {offsets = [4, 0], sizes = [1, 8], strides = [1, 1]} : vector<8x8xf32> to vector<1x8xf32>
    %30 = vector.shape_cast %29 : vector<1x8xf32> to vector<1x8x1xf32>
    %31 = vector.extract_strided_slice %0 {offsets = [0, 4, 0], sizes = [8, 1, 16], strides = [1, 1, 1]} : vector<8x8x16xf32> to vector<8x1x16xf32>
    %32 = vector.broadcast %30 : vector<1x8x1xf32> to vector<8x8x16xf32>
    %33 = vector.broadcast %31 : vector<8x1x16xf32> to vector<8x8x16xf32>
    %34 = arith.mulf %32, %33 : vector<8x8x16xf32>
    %35 = arith.maximumf %28, %34 : vector<8x8x16xf32>
    %36 = vector.extract_strided_slice %1 {offsets = [5, 0], sizes = [1, 8], strides = [1, 1]} : vector<8x8xf32> to vector<1x8xf32>
    %37 = vector.shape_cast %36 : vector<1x8xf32> to vector<1x8x1xf32>
    %38 = vector.extract_strided_slice %0 {offsets = [0, 5, 0], sizes = [8, 1, 16], strides = [1, 1, 1]} : vector<8x8x16xf32> to vector<8x1x16xf32>
    %39 = vector.broadcast %37 : vector<1x8x1xf32> to vector<8x8x16xf32>
    %40 = vector.broadcast %38 : vector<8x1x16xf32> to vector<8x8x16xf32>
    %41 = arith.mulf %39, %40 : vector<8x8x16xf32>
    %42 = arith.maximumf %35, %41 : vector<8x8x16xf32>
    %43 = vector.extract_strided_slice %1 {offsets = [6, 0], sizes = [1, 8], strides = [1, 1]} : vector<8x8xf32> to vector<1x8xf32>
    %44 = vector.shape_cast %43 : vector<1x8xf32> to vector<1x8x1xf32>
    %45 = vector.extract_strided_slice %0 {offsets = [0, 6, 0], sizes = [8, 1, 16], strides = [1, 1, 1]} : vector<8x8x16xf32> to vector<8x1x16xf32>
    %46 = vector.broadcast %44 : vector<1x8x1xf32> to vector<8x8x16xf32>
    %47 = vector.broadcast %45 : vector<8x1x16xf32> to vector<8x8x16xf32>
    %48 = arith.mulf %46, %47 : vector<8x8x16xf32>
    %49 = arith.maximumf %42, %48 : vector<8x8x16xf32>
    %50 = vector.extract_strided_slice %1 {offsets = [7, 0], sizes = [1, 8], strides = [1, 1]} : vector<8x8xf32> to vector<1x8xf32>
    %51 = vector.shape_cast %50 : vector<1x8xf32> to vector<1x8x1xf32>
    %52 = vector.extract_strided_slice %0 {offsets = [0, 7, 0], sizes = [8, 1, 16], strides = [1, 1, 1]} : vector<8x8x16xf32> to vector<8x1x16xf32>
    %53 = vector.broadcast %51 : vector<1x8x1xf32> to vector<8x8x16xf32>
    %54 = vector.broadcast %52 : vector<8x1x16xf32> to vector<8x8x16xf32>
    %55 = arith.mulf %53, %54 : vector<8x8x16xf32>
    %56 = arith.maximumf %49, %55 : vector<8x8x16xf32>
    %c0_i32 = arith.constant 0 : i32
    %57 = arith.cmpi eq, %arg2, %c0_i32 : i32
    %58 = arith.extui %57 : i1 to i32
    %c0_i32_4 = arith.constant 0 : i32
    %59 = arith.cmpi ne, %58, %c0_i32_4 : i32
    scf.if %59 {
      %c0_7 = arith.constant 0 : index
      %c0_8 = arith.constant 0 : index
      %c0_9 = arith.constant 0 : index
      %63 = vector.load %arg5[%c0_7, %c0_8, %c0_9] : memref<8x8x16xf32, #tpu.memory_space<vmem>>, vector<8x8x16xf32>
      tpu.vector_store %arg5[%c0_7, %c0_8, %c0_9], %56 {strides = array<i32>} : memref<8x8x16xf32, #tpu.memory_space<vmem>>, vector<8x8x16xf32>,
    } else {
    }
    %c0_i32_5 = arith.constant 0 : i32
    %60 = arith.cmpi sgt, %arg2, %c0_i32_5 : i32
    %61 = arith.extui %60 : i1 to i32
    %c0_i32_6 = arith.constant 0 : i32
    %62 = arith.cmpi ne, %61, %c0_i32_6 : i32
    scf.if %62 {
      %c0_7 = arith.constant 0 : index
      %c0_8 = arith.constant 0 : index
      %c0_9 = arith.constant 0 : index
      %63 = vector.load %arg5[%c0_7, %c0_8, %c0_9] : memref<8x8x16xf32, #tpu.memory_space<vmem>>, vector<8x8x16xf32>
      %64 = arith.maximumf %63, %56 : vector<8x8x16xf32>
      %c0_10 = arith.constant 0 : index
      %c0_11 = arith.constant 0 : index
      %c0_12 = arith.constant 0 : index
      %65 = vector.load %arg5[%c0_10, %c0_11, %c0_12] : memref<8x8x16xf32, #tpu.memory_space<vmem>>, vector<8x8x16xf32>
      tpu.vector_store %arg5[%c0_10, %c0_11, %c0_12], %64 {strides = array<i32>} : memref<8x8x16xf32, #tpu.memory_space<vmem>>, vector<8x8x16xf32>,
    } else {
    }
    return
  }
  func.func @transform_0(%arg0: i32, %arg1: i32, %arg2: i32) -> (i32, i32, i32) {
    %c0_i32 = arith.constant 0 : i32
    return %arg0, %arg2, %arg1 : i32, i32, i32
  }
  func.func @transform_1(%arg0: i32, %arg1: i32, %arg2: i32) -> (i32, i32) {
    %c0_i32 = arith.constant 0 : i32
    %c0_i32_0 = arith.constant 0 : i32
    return %arg2, %c0_i32 : i32, i32
  }
  func.func @transform_2(%arg0: i32, %arg1: i32, %arg2: i32) -> (i32, i32, i32) {
    %c0_i32 = arith.constant 0 : i32
    %c0_i32_0 = arith.constant 0 : i32
    return %arg0, %c0_i32, %arg1 : i32, i32, i32
  }
}

</mosaic_0001>

<llo_original>
// kernel: tpu_custom_call.1
$region0: #{tpu_custom_call.1}
  #allocation0 [shape = 'u32[]', space=smem, size = 0x4, offset = 0x4, fixed_abs, tag = 'smem constant byte address 0x4 - core index']
  #allocation1 [shape = 'u32[144,128]{1,0:T(1,128)}', space=vmem, size = 0x12000, scoped, tag = 'internal scratch']
  %s0 = inlined_call_operand.hbm [shape: f32[8,8,16], index: 0, kind: input, shape index: {}]
  %s1 = inlined_call_operand.hbm [shape: f32[8,8], index: 1, kind: input, shape index: {}]
  %s2 = inlined_call_operand.hbm [shape: f32[8,8,16], index: 2, kind: output, shape index: {}]
  %s3 = sld [smem:[#allocation0]]
  $region34: #{tpu_custom_call.1} parent=0
    _
  %s5 = ssub.s32 1, %s3
  %s6 = scalar_select 0, %s5, %s3
  $region1: #{tpu_custom_call.1} parent=0
    #allocation2 [shape = 'u8[32768]{0}', space=vmem, size = 0x8000, scoped, tag = 'input window, operand 0, single buffered']
    #allocation3 [shape = 's32[1]{0}', space=sflag, size = 0x4, scoped, tag = 'scoped memory for tpu_custom_call.1']
    #allocation4 [shape = 's32[1]{0}', space=sflag, size = 0x4, scoped, tag = 'scoped memory for tpu_custom_call.1']
    #allocation5 [shape = 'u8[4096]{0}', space=vmem, size = 0x1000, scoped, tag = 'input window, operand 1, single buffered']
    #allocation6 [shape = 's32[1]{0}', space=sflag, size = 0x4, scoped, tag = 'scoped memory for tpu_custom_call.1']
    #allocation7 [shape = 'u8[32768]{0}', space=vmem, size = 0x8000, scoped, tag = 'output window, operand 0, single buffered']
    %7 = vsyncpa [#allocation3], 0
    %8 = vsyncpa [#allocation6], 0
    %9 = vsyncpa [#allocation4], 0
    // Predicated region
    $region2: #{tpu_custom_call.1} parent=1 // pred_check
      _
    $region3: #{tpu_custom_call.1} parent=1 // pred_check_branch
      %11 = sbr.rel (0) target = $region5
    $region4: #{tpu_custom_call.1} parent=1 // pred_region
      %s13 = ssub.s32 1024, 1024
      %14 = vsyncadd [#allocation3], %s13
      %s15 = sshll.u32 [#allocation2], 4
      %s16 = int_to_ptr.vmem [resolvable:$true] %s15
      %21 = dma.hbm_to_vmem [thread:$0]  %s0, 1024, %s16, [#allocation3], 128, 128, 8
    $region5: #{tpu_custom_call.1} parent=1 // pred_fallthru
      _
    // Predicated region
    $region6: #{tpu_custom_call.1} parent=1 // pred_check
      _
    $region7: #{tpu_custom_call.1} parent=1 // pred_check_branch
      %23 = sbr.rel (0) target = $region9
    $region8: #{tpu_custom_call.1} parent=1 // pred_region
      %s25 = ssub.s32 128, 128
      %26 = vsyncadd [#allocation6], %s25
      %s28 = sshll.u32 [#allocation5], 4
      %s29 = int_to_ptr.vmem [resolvable:$true] %s28
      %31 = dma.hbm_to_vmem [thread:$0]  %s1, 128, %s29, [#allocation6]
    $region9: #{tpu_custom_call.1} parent=1 // pred_fallthru
      _
    // Predicated region
    $region10: #{tpu_custom_call.1} parent=1 // pred_check
      _
    $region11: #{tpu_custom_call.1} parent=1 // pred_check_branch
      %33 = sbr.rel (0) target = $region13
    $region12: #{tpu_custom_call.1} parent=1 // pred_region
      %34 = dma.done [#allocation3], 1024
    $region13: #{tpu_custom_call.1} parent=1 // pred_fallthru
      _
    // Predicated region
    $region14: #{tpu_custom_call.1} parent=1 // pred_check
      _
    $region15: #{tpu_custom_call.1} parent=1 // pred_check_branch
      %36 = sbr.rel (0) target = $region17
    $region16: #{tpu_custom_call.1} parent=1 // pred_region
      %37 = dma.done [#allocation6], 128
    $region17: #{tpu_custom_call.1} parent=1 // pred_fallthru
      _
    %v38 = vld [vmem:[#allocation2] sm:$0xff]
    %v39 = vld [vmem:[#allocation2 + $0x8] sm:$0xff]
    %v40 = vld [vmem:[#allocation2 + $0x10] sm:$0xff]
    %v41 = vld [vmem:[#allocation2 + $0x18] sm:$0xff]
    %v42 = vld [vmem:[#allocation2 + $0x20] sm:$0xff]
    %v43 = vld [vmem:[#allocation2 + $0x28] sm:$0xff]
    %v44 = vld [vmem:[#allocation2 + $0x30] sm:$0xff]
    %v45 = vld [vmem:[#allocation2 + $0x38] sm:$0xff]
    %v46 = vld [vmem:[#allocation5] sm:$0xff]
    %v47 = vlaneseq
    %v48 = vshrl.u32 %v47, 7
    %v49 = vsub.s32 0, %v48
    %v50 = vrot.slane %v46, %v49
    %52 = vbcast.lane.b32.xlu0 %v50, 256
    %v53 = vpop.permute.xlu0 %52
    %v54 = vlaneseq
    %v55 = vshrl.u32 %v54, 7
    %v56 = vsub.s32 0, %v55
    %v57 = vrot.slane %v38, %v56
    %v58 = vlaneseq
    %v59 = vshrl.u32 %v58, 7
    %v60 = vsub.s32 0, %v59
    %v61 = vrot.slane %v39, %v60
    %v62 = vlaneseq
    %v63 = vshrl.u32 %v62, 7
    %v64 = vsub.s32 0, %v63
    %v65 = vrot.slane %v40, %v64
    %v66 = vlaneseq
    %v67 = vshrl.u32 %v66, 7
    %v68 = vsub.s32 0, %v67
    %v69 = vrot.slane %v41, %v68
    %v70 = vlaneseq
    %v71 = vshrl.u32 %v70, 7
    %v72 = vsub.s32 0, %v71
    %v73 = vrot.slane %v42, %v72
    %v74 = vlaneseq
    %v75 = vshrl.u32 %v74, 7
    %v76 = vsub.s32 0, %v75
    %v77 = vrot.slane %v43, %v76
    %v78 = vlaneseq
    %v79 = vshrl.u32 %v78, 7
    %v80 = vsub.s32 0, %v79
    %v81 = vrot.slane %v44, %v80
    %v82 = vlaneseq
    %v83 = vshrl.u32 %v82, 7
    %v84 = vsub.s32 0, %v83
    %v85 = vrot.slane %v45, %v84
    %v86 = vmul.f32 %v53, %v57
    %v87 = vmul.f32 %v53, %v61
    %v88 = vmul.f32 %v53, %v65
    %v89 = vmul.f32 %v53, %v69
    %v90 = vmul.f32 %v53, %v73
    %v91 = vmul.f32 %v53, %v77
    %v92 = vmul.f32 %v53, %v81
    %v93 = vmul.f32 %v53, %v85
    %v94 = vlaneseq
    %v95 = vshrl.u32 %v94, 7
    %v96 = vsub.s32 1, %v95
    %v97 = vrot.slane %v46, %v96
    %99 = vbcast.lane.b32.xlu0 %v97, 256
    %v100 = vpop.permute.xlu0 %99
    %v101 = vlaneseq
    %v102 = vshrl.u32 %v101, 7
    %v103 = vsub.s32 1, %v102
    %v104 = vrot.slane %v38, %v103
    %v105 = vlaneseq
    %v106 = vshrl.u32 %v105, 7
    %v107 = vsub.s32 1, %v106
    %v108 = vrot.slane %v39, %v107
    %v109 = vlaneseq
    %v110 = vshrl.u32 %v109, 7
    %v111 = vsub.s32 1, %v110
    %v112 = vrot.slane %v40, %v111
    %v113 = vlaneseq
    %v114 = vshrl.u32 %v113, 7
    %v115 = vsub.s32 1, %v114
    %v116 = vrot.slane %v41, %v115
    %v117 = vlaneseq
    %v118 = vshrl.u32 %v117, 7
    %v119 = vsub.s32 1, %v118
    %v120 = vrot.slane %v42, %v119
    %v121 = vlaneseq
    %v122 = vshrl.u32 %v121, 7
    %v123 = vsub.s32 1, %v122
    %v124 = vrot.slane %v43, %v123
    %v125 = vlaneseq
    %v126 = vshrl.u32 %v125, 7
    %v127 = vsub.s32 1, %v126
    %v128 = vrot.slane %v44, %v127
    %v129 = vlaneseq
    %v130 = vshrl.u32 %v129, 7
    %v131 = vsub.s32 1, %v130
    %v132 = vrot.slane %v45, %v131
    %v133 = vmul.f32 %v100, %v104
    %v134 = vmul.f32 %v100, %v108
    %v135 = vmul.f32 %v100, %v112
    %v136 = vmul.f32 %v100, %v116
    %v137 = vmul.f32 %v100, %v120
    %v138 = vmul.f32 %v100, %v124
    %v139 = vmul.f32 %v100, %v128
    %v140 = vmul.f32 %v100, %v132
    %v141 = vmax.f32 %v86, %v133
    %v142 = vmax.f32 %v87, %v134
    %v143 = vmax.f32 %v88, %v135
    %v144 = vmax.f32 %v89, %v136
    %v145 = vmax.f32 %v90, %v137
    %v146 = vmax.f32 %v91, %v138
    %v147 = vmax.f32 %v92, %v139
    %v148 = vmax.f32 %v93, %v140
    %v149 = vlaneseq
    %v150 = vshrl.u32 %v149, 7
    %v151 = vsub.s32 2, %v150
    %v152 = vrot.slane %v46, %v151
    %154 = vbcast.lane.b32.xlu0 %v152, 256
    %v155 = vpop.permute.xlu0 %154
    %v156 = vlaneseq
    %v157 = vshrl.u32 %v156, 7
    %v158 = vsub.s32 2, %v157
    %v159 = vrot.slane %v38, %v158
    %v160 = vlaneseq
    %v161 = vshrl.u32 %v160, 7
    %v162 = vsub.s32 2, %v161
    %v163 = vrot.slane %v39, %v162
    %v164 = vlaneseq
    %v165 = vshrl.u32 %v164, 7
    %v166 = vsub.s32 2, %v165
    %v167 = vrot.slane %v40, %v166
    %v168 = vlaneseq
    %v169 = vshrl.u32 %v168, 7
    %v170 = vsub.s32 2, %v169
    %v171 = vrot.slane %v41, %v170
    %v172 = vlaneseq
    %v173 = vshrl.u32 %v172, 7
    %v174 = vsub.s32 2, %v173
    %v175 = vrot.slane %v42, %v174
    %v176 = vlaneseq
    %v177 = vshrl.u32 %v176, 7
    %v178 = vsub.s32 2, %v177
    %v179 = vrot.slane %v43, %v178
    %v180 = vlaneseq
    %v181 = vshrl.u32 %v180, 7
    %v182 = vsub.s32 2, %v181
    %v183 = vrot.slane %v44, %v182
    %v184 = vlaneseq
    %v185 = vshrl.u32 %v184, 7
    %v186 = vsub.s32 2, %v185
    %v187 = vrot.slane %v45, %v186
    %v188 = vmul.f32 %v155, %v159
    %v189 = vmul.f32 %v155, %v163
    %v190 = vmul.f32 %v155, %v167
    %v191 = vmul.f32 %v155, %v171
    %v192 = vmul.f32 %v155, %v175
    %v193 = vmul.f32 %v155, %v179
    %v194 = vmul.f32 %v155, %v183
    %v195 = vmul.f32 %v155, %v187
    %v196 = vmax.f32 %v141, %v188
    %v197 = vmax.f32 %v142, %v189
    %v198 = vmax.f32 %v143, %v190
    %v199 = vmax.f32 %v144, %v191
    %v200 = vmax.f32 %v145, %v192
    %v201 = vmax.f32 %v146, %v193
    %v202 = vmax.f32 %v147, %v194
    %v203 = vmax.f32 %v148, %v195
    %v204 = vlaneseq
    %v205 = vshrl.u32 %v204, 7
    %v206 = vsub.s32 3, %v205
    %v207 = vrot.slane %v46, %v206
    %209 = vbcast.lane.b32.xlu0 %v207, 256
    %v210 = vpop.permute.xlu0 %209
    %v211 = vlaneseq
    %v212 = vshrl.u32 %v211, 7
    %v213 = vsub.s32 3, %v212
    %v214 = vrot.slane %v38, %v213
    %v215 = vlaneseq
    %v216 = vshrl.u32 %v215, 7
    %v217 = vsub.s32 3, %v216
    %v218 = vrot.slane %v39, %v217
    %v219 = vlaneseq
    %v220 = vshrl.u32 %v219, 7
    %v221 = vsub.s32 3, %v220
    %v222 = vrot.slane %v40, %v221
    %v223 = vlaneseq
    %v224 = vshrl.u32 %v223, 7
    %v225 = vsub.s32 3, %v224
    %v226 = vrot.slane %v41, %v225
    %v227 = vlaneseq
    %v228 = vshrl.u32 %v227, 7
    %v229 = vsub.s32 3, %v228
    %v230 = vrot.slane %v42, %v229
    %v231 = vlaneseq
    %v232 = vshrl.u32 %v231, 7
    %v233 = vsub.s32 3, %v232
    %v234 = vrot.slane %v43, %v233
    %v235 = vlaneseq
    %v236 = vshrl.u32 %v235, 7
    %v237 = vsub.s32 3, %v236
    %v238 = vrot.slane %v44, %v237
    %v239 = vlaneseq
    %v240 = vshrl.u32 %v239, 7
    %v241 = vsub.s32 3, %v240
    %v242 = vrot.slane %v45, %v241
    %v243 = vmul.f32 %v210, %v214
    %v244 = vmul.f32 %v210, %v218
    %v245 = vmul.f32 %v210, %v222
    %v246 = vmul.f32 %v210, %v226
    %v247 = vmul.f32 %v210, %v230
    %v248 = vmul.f32 %v210, %v234
    %v249 = vmul.f32 %v210, %v238
    %v250 = vmul.f32 %v210, %v242
    %v251 = vmax.f32 %v196, %v243
    %v252 = vmax.f32 %v197, %v244
    %v253 = vmax.f32 %v198, %v245
    %v254 = vmax.f32 %v199, %v246
    %v255 = vmax.f32 %v200, %v247
    %v256 = vmax.f32 %v201, %v248
    %v257 = vmax.f32 %v202, %v249
    %v258 = vmax.f32 %v203, %v250
    %v259 = vlaneseq
    %v260 = vshrl.u32 %v259, 7
    %v261 = vsub.s32 4, %v260
    %v262 = vrot.slane %v46, %v261
    %264 = vbcast.lane.b32.xlu0 %v262, 256
    %v265 = vpop.permute.xlu0 %264
    %v266 = vlaneseq
    %v267 = vshrl.u32 %v266, 7
    %v268 = vsub.s32 4, %v267
    %v269 = vrot.slane %v38, %v268
    %v270 = vlaneseq
    %v271 = vshrl.u32 %v270, 7
    %v272 = vsub.s32 4, %v271
    %v273 = vrot.slane %v39, %v272
    %v274 = vlaneseq
    %v275 = vshrl.u32 %v274, 7
    %v276 = vsub.s32 4, %v275
    %v277 = vrot.slane %v40, %v276
    %v278 = vlaneseq
    %v279 = vshrl.u32 %v278, 7
    %v280 = vsub.s32 4, %v279
    %v281 = vrot.slane %v41, %v280
    %v282 = vlaneseq
    %v283 = vshrl.u32 %v282, 7
    %v284 = vsub.s32 4, %v283
    %v285 = vrot.slane %v42, %v284
    %v286 = vlaneseq
    %v287 = vshrl.u32 %v286, 7
    %v288 = vsub.s32 4, %v287
    %v289 = vrot.slane %v43, %v288
    %v290 = vlaneseq
    %v291 = vshrl.u32 %v290, 7
    %v292 = vsub.s32 4, %v291
    %v293 = vrot.slane %v44, %v292
    %v294 = vlaneseq
    %v295 = vshrl.u32 %v294, 7
    %v296 = vsub.s32 4, %v295
    %v297 = vrot.slane %v45, %v296
    %v298 = vmul.f32 %v265, %v269
    %v299 = vmul.f32 %v265, %v273
    %v300 = vmul.f32 %v265, %v277
    %v301 = vmul.f32 %v265, %v281
    %v302 = vmul.f32 %v265, %v285
    %v303 = vmul.f32 %v265, %v289
    %v304 = vmul.f32 %v265, %v293
    %v305 = vmul.f32 %v265, %v297
    %v306 = vmax.f32 %v251, %v298
    %v307 = vmax.f32 %v252, %v299
    %v308 = vmax.f32 %v253, %v300
    %v309 = vmax.f32 %v254, %v301
    %v310 = vmax.f32 %v255, %v302
    %v311 = vmax.f32 %v256, %v303
    %v312 = vmax.f32 %v257, %v304
    %v313 = vmax.f32 %v258, %v305
    %v314 = vlaneseq
    %v315 = vshrl.u32 %v314, 7
    %v316 = vsub.s32 5, %v315
    %v317 = vrot.slane %v46, %v316
    %319 = vbcast.lane.b32.xlu0 %v317, 256
    %v320 = vpop.permute.xlu0 %319
    %v321 = vlaneseq
    %v322 = vshrl.u32 %v321, 7
    %v323 = vsub.s32 5, %v322
    %v324 = vrot.slane %v38, %v323
    %v325 = vlaneseq
    %v326 = vshrl.u32 %v325, 7
    %v327 = vsub.s32 5, %v326
    %v328 = vrot.slane %v39, %v327
    %v329 = vlaneseq
    %v330 = vshrl.u32 %v329, 7
    %v331 = vsub.s32 5, %v330
    %v332 = vrot.slane %v40, %v331
    %v333 = vlaneseq
    %v334 = vshrl.u32 %v333, 7
    %v335 = vsub.s32 5, %v334
    %v336 = vrot.slane %v41, %v335
    %v337 = vlaneseq
    %v338 = vshrl.u32 %v337, 7
    %v339 = vsub.s32 5, %v338
    %v340 = vrot.slane %v42, %v339
    %v341 = vlaneseq
    %v342 = vshrl.u32 %v341, 7
    %v343 = vsub.s32 5, %v342
    %v344 = vrot.slane %v43, %v343
    %v345 = vlaneseq
    %v346 = vshrl.u32 %v345, 7
    %v347 = vsub.s32 5, %v346
    %v348 = vrot.slane %v44, %v347
    %v349 = vlaneseq
    %v350 = vshrl.u32 %v349, 7
    %v351 = vsub.s32 5, %v350
    %v352 = vrot.slane %v45, %v351
    %v353 = vmul.f32 %v320, %v324
    %v354 = vmul.f32 %v320, %v328
    %v355 = vmul.f32 %v320, %v332
    %v356 = vmul.f32 %v320, %v336
    %v357 = vmul.f32 %v320, %v340
    %v358 = vmul.f32 %v320, %v344
    %v359 = vmul.f32 %v320, %v348
    %v360 = vmul.f32 %v320, %v352
    %v361 = vmax.f32 %v306, %v353
    %v362 = vmax.f32 %v307, %v354
    %v363 = vmax.f32 %v308, %v355
    %v364 = vmax.f32 %v309, %v356
    %v365 = vmax.f32 %v310, %v357
    %v366 = vmax.f32 %v311, %v358
    %v367 = vmax.f32 %v312, %v359
    %v368 = vmax.f32 %v313, %v360
    %v369 = vlaneseq
    %v370 = vshrl.u32 %v369, 7
    %v371 = vsub.s32 6, %v370
    %v372 = vrot.slane %v46, %v371
    %374 = vbcast.lane.b32.xlu0 %v372, 256
    %v375 = vpop.permute.xlu0 %374
    %v376 = vlaneseq
    %v377 = vshrl.u32 %v376, 7
    %v378 = vsub.s32 6, %v377
    %v379 = vrot.slane %v38, %v378
    %v380 = vlaneseq
    %v381 = vshrl.u32 %v380, 7
    %v382 = vsub.s32 6, %v381
    %v383 = vrot.slane %v39, %v382
    %v384 = vlaneseq
    %v385 = vshrl.u32 %v384, 7
    %v386 = vsub.s32 6, %v385
    %v387 = vrot.slane %v40, %v386
    %v388 = vlaneseq
    %v389 = vshrl.u32 %v388, 7
    %v390 = vsub.s32 6, %v389
    %v391 = vrot.slane %v41, %v390
    %v392 = vlaneseq
    %v393 = vshrl.u32 %v392, 7
    %v394 = vsub.s32 6, %v393
    %v395 = vrot.slane %v42, %v394
    %v396 = vlaneseq
    %v397 = vshrl.u32 %v396, 7
    %v398 = vsub.s32 6, %v397
    %v399 = vrot.slane %v43, %v398
    %v400 = vlaneseq
    %v401 = vshrl.u32 %v400, 7
    %v402 = vsub.s32 6, %v401
    %v403 = vrot.slane %v44, %v402
    %v404 = vlaneseq
    %v405 = vshrl.u32 %v404, 7
    %v406 = vsub.s32 6, %v405
    %v407 = vrot.slane %v45, %v406
    %v408 = vmul.f32 %v375, %v379
    %v409 = vmul.f32 %v375, %v383
    %v410 = vmul.f32 %v375, %v387
    %v411 = vmul.f32 %v375, %v391
    %v412 = vmul.f32 %v375, %v395
    %v413 = vmul.f32 %v375, %v399
    %v414 = vmul.f32 %v375, %v403
    %v415 = vmul.f32 %v375, %v407
    %v416 = vmax.f32 %v361, %v408
    %v417 = vmax.f32 %v362, %v409
    %v418 = vmax.f32 %v363, %v410
    %v419 = vmax.f32 %v364, %v411
    %v420 = vmax.f32 %v365, %v412
    %v421 = vmax.f32 %v366, %v413
    %v422 = vmax.f32 %v367, %v414
    %v423 = vmax.f32 %v368, %v415
    %v424 = vlaneseq
    %v425 = vshrl.u32 %v424, 7
    %v426 = vsub.s32 7, %v425
    %v427 = vrot.slane %v46, %v426
    %429 = vbcast.lane.b32.xlu0 %v427, 256
    %v430 = vpop.permute.xlu0 %429
    %v431 = vlaneseq
    %v432 = vshrl.u32 %v431, 7
    %v433 = vsub.s32 7, %v432
    %v434 = vrot.slane %v38, %v433
    %v435 = vlaneseq
    %v436 = vshrl.u32 %v435, 7
    %v437 = vsub.s32 7, %v436
    %v438 = vrot.slane %v39, %v437
    %v439 = vlaneseq
    %v440 = vshrl.u32 %v439, 7
    %v441 = vsub.s32 7, %v440
    %v442 = vrot.slane %v40, %v441
    %v443 = vlaneseq
    %v444 = vshrl.u32 %v443, 7
    %v445 = vsub.s32 7, %v444
    %v446 = vrot.slane %v41, %v445
    %v447 = vlaneseq
    %v448 = vshrl.u32 %v447, 7
    %v449 = vsub.s32 7, %v448
    %v450 = vrot.slane %v42, %v449
    %v451 = vlaneseq
    %v452 = vshrl.u32 %v451, 7
    %v453 = vsub.s32 7, %v452
    %v454 = vrot.slane %v43, %v453
    %v455 = vlaneseq
    %v456 = vshrl.u32 %v455, 7
    %v457 = vsub.s32 7, %v456
    %v458 = vrot.slane %v44, %v457
    %v459 = vlaneseq
    %v460 = vshrl.u32 %v459, 7
    %v461 = vsub.s32 7, %v460
    %v462 = vrot.slane %v45, %v461
    %v463 = vmul.f32 %v430, %v434
    %v464 = vmul.f32 %v430, %v438
    %v465 = vmul.f32 %v430, %v442
    %v466 = vmul.f32 %v430, %v446
    %v467 = vmul.f32 %v430, %v450
    %v468 = vmul.f32 %v430, %v454
    %v469 = vmul.f32 %v430, %v458
    %v470 = vmul.f32 %v430, %v462
    %v471 = vmax.f32 %v416, %v463
    %v472 = vmax.f32 %v417, %v464
    %v473 = vmax.f32 %v418, %v465
    %v474 = vmax.f32 %v419, %v466
    %v475 = vmax.f32 %v420, %v467
    %v476 = vmax.f32 %v421, %v468
    %v477 = vmax.f32 %v422, %v469
    %v478 = vmax.f32 %v423, %v470
    %p479 = scmp.eq.s32.totalorder 0, 0
    // Predicated region
    $region18: #{tpu_custom_call.1} parent=1 // pred_check
      %p480 = pneg %p479
    $region19: #{tpu_custom_call.1} parent=1 // pred_check_branch
      %482 = sbr.rel (%p480) target = $region21
    $region20: #{tpu_custom_call.1} parent=1 // pred_region
      %vm483 = vcmask 130048
      %484 = vst.msk [vmem:[#allocation7] sm:$0xff] %vm483, %v471
      %485 = vst.msk [vmem:[#allocation7 + $0x8] sm:$0xff] %vm483, %v472
      %486 = vst.msk [vmem:[#allocation7 + $0x10] sm:$0xff] %vm483, %v473
      %487 = vst.msk [vmem:[#allocation7 + $0x18] sm:$0xff] %vm483, %v474
      %488 = vst.msk [vmem:[#allocation7 + $0x20] sm:$0xff] %vm483, %v475
      %489 = vst.msk [vmem:[#allocation7 + $0x28] sm:$0xff] %vm483, %v476
      %490 = vst.msk [vmem:[#allocation7 + $0x30] sm:$0xff] %vm483, %v477
      %491 = vst.msk [vmem:[#allocation7 + $0x38] sm:$0xff] %vm483, %v478
    $region21: #{tpu_custom_call.1} parent=1 // pred_fallthru
      _
    %p492 = scmp.gt.s32.totalorder 0, 0
    // Predicated region
    $region22: #{tpu_custom_call.1} parent=1 // pred_check
      %p493 = pneg %p492
    $region23: #{tpu_custom_call.1} parent=1 // pred_check_branch
      %495 = sbr.rel (%p493) target = $region25
    $region24: #{tpu_custom_call.1} parent=1 // pred_region
      %v496 = vld [vmem:[#allocation7] sm:$0xff]
      %v497 = vld [vmem:[#allocation7 + $0x8] sm:$0xff]
      %v498 = vld [vmem:[#allocation7 + $0x10] sm:$0xff]
      %v499 = vld [vmem:[#allocation7 + $0x18] sm:$0xff]
      %v500 = vld [vmem:[#allocation7 + $0x20] sm:$0xff]
      %v501 = vld [vmem:[#allocation7 + $0x28] sm:$0xff]
      %v502 = vld [vmem:[#allocation7 + $0x30] sm:$0xff]
      %v503 = vld [vmem:[#allocation7 + $0x38] sm:$0xff]
      %v504 = vmax.f32 %v496, %v471
      %v505 = vmax.f32 %v497, %v472
      %v506 = vmax.f32 %v498, %v473
      %v507 = vmax.f32 %v499, %v474
      %v508 = vmax.f32 %v500, %v475
      %v509 = vmax.f32 %v501, %v476
      %v510 = vmax.f32 %v502, %v477
      %v511 = vmax.f32 %v503, %v478
      %vm512 = vcmask 130048
      %513 = vst.msk [vmem:[#allocation7] sm:$0xff] %vm512, %v504
      %514 = vst.msk [vmem:[#allocation7 + $0x8] sm:$0xff] %vm512, %v505
      %515 = vst.msk [vmem:[#allocation7 + $0x10] sm:$0xff] %vm512, %v506
      %516 = vst.msk [vmem:[#allocation7 + $0x18] sm:$0xff] %vm512, %v507
      %517 = vst.msk [vmem:[#allocation7 + $0x20] sm:$0xff] %vm512, %v508
      %518 = vst.msk [vmem:[#allocation7 + $0x28] sm:$0xff] %vm512, %v509
      %519 = vst.msk [vmem:[#allocation7 + $0x30] sm:$0xff] %vm512, %v510
      %520 = vst.msk [vmem:[#allocation7 + $0x38] sm:$0xff] %vm512, %v511
    $region25: #{tpu_custom_call.1} parent=1 // pred_fallthru
      _
    // Predicated region
    $region26: #{tpu_custom_call.1} parent=1 // pred_check
      _
    $region27: #{tpu_custom_call.1} parent=1 // pred_check_branch
      %522 = sbr.rel (0) target = $region29
    $region28: #{tpu_custom_call.1} parent=1 // pred_region
      %s524 = ssub.s32 1024, 1024
      %525 = vsyncadd [#allocation4], %s524
      %s526 = sshll.u32 [#allocation7], 4
      %s527 = int_to_ptr.vmem [resolvable:$true] %s526
      %532 = dma.vmem_to_hbm [thread:$0]  %s527, 1024, %s2, [#allocation4], 128, 128, 8
    $region29: #{tpu_custom_call.1} parent=1 // pred_fallthru
      _
    // Predicated region
    $region30: #{tpu_custom_call.1} parent=1 // pred_check
      _
    $region31: #{tpu_custom_call.1} parent=1 // pred_check_branch
      %534 = sbr.rel (0) target = $region33
    $region32: #{tpu_custom_call.1} parent=1 // pred_region
      %535 = dma.done [#allocation4], 1024
    $region33: #{tpu_custom_call.1} parent=1 // pred_fallthru
      _
    %536 = vsyncpa [#allocation3], 1
    %537 = vsyncpa [#allocation6], 1
    %538 = vsyncpa [#allocation4], 1

</llo_original>
